<compile_context>
chip_gen: v5e
topology: v5e:2x2
jax: 0.10.0
libtpu: 0.0.40
codegen_flags: <defaults>
</compile_context>

<pallas_src>
import functools

import jax
import jax.numpy as jnp
from jax.experimental import pallas as pl
from jax.experimental.pallas import tpu as pltpu

N_LAYERS = 4
HIDDEN = 64            # module default hidden=64
D_SYM = 4              # symmetrized output matrices are (D_SYM, D_SYM)
DIM_H = D_SYM * D_SYM
DIM_G = D_SYM * D_SYM
DIM_OUT = DIM_H + DIM_G            # fused fc_h|fc_g output width (32)
VOCAB = 120                        # nn.Embedding(120, hidden)
VOCAB_PAD = 128                    # padded to a full lane width
NODE_TILE = 1024                   # LHS row tile (amortizes per-step overhead)


def _round_up(n, m):
    return ((n + m - 1) // m) * m


def _device_kind():
    try:
        return jax.devices()[0].device_kind.lower()
    except Exception:  # pragma: no cover - defensive; backend without devices
        return ""


def _gnn_kernel(z_ref, embed_ref, wl_ref, out_ref, *, gate_bf16):
    """One node tile: in-kernel embedding gather (one-hot MXU matmul),
    4x (matmul + SiLU gate), node-sum pooled into the per-split output block."""
    t = pl.program_id(1)

    @pl.when(t == 0)
    def _():
        out_ref[...] = jnp.zeros_like(out_ref)

    # --- embedding gather as a one-hot MXU matmul; one-hot built in bf16 ---
    tn = z_ref.shape[0]
    z = z_ref[...]                                              # (tn, 1) int32
    lane_ids = jax.lax.broadcasted_iota(jnp.int32, (tn, VOCAB_PAD), 1)
    onehot = (z == lane_ids).astype(embed_ref.dtype)            # (tn,128) bf16
    x = jnp.dot(onehot, embed_ref[...],
                preferred_element_type=jnp.float32)             # (tn, HIDDEN) f32

    # --- 4x FullyConnectedTensorProduct('0e', sh, '0e') + scalar Gate (SiLU).
    # With scalar node irreps only the Y0 channel couples and Y0 == 1, so each
    # layer is a plain matmul (bf16 inputs, f32 MXU accumulation) + SiLU.
    if gate_bf16:
        # v6e / v7x: gate in bf16 (EUP/VALU halve their per-layer vector ops).
        x = x.astype(jnp.bfloat16)
        for l in range(N_LAYERS):
            y = jnp.dot(x, wl_ref[l], preferred_element_type=jnp.float32)
            y = y.astype(jnp.bfloat16)
            x = y * jax.nn.sigmoid(y)
        x = x.astype(jnp.float32)
    else:
        # v5e: no bf16 VPU/EUP -> keep the gate math in f32.
        for l in range(N_LAYERS):
            y = jnp.dot(x.astype(jnp.bfloat16), wl_ref[l],
                        preferred_element_type=jnp.float32)
            x = y * jax.nn.sigmoid(y)

    # --- node-sum pooling, accumulated across node tiles into the resident
    #     per-split output block (f32).
    out_ref[...] += jnp.sum(x, axis=0).reshape(1, 1, HIDDEN)


def gnn_h_forward(Z, pos, ghost, packed):
    """Full GNN_H forward.  Z: (N,) int32, pos: (N,3), ghost: (N,) (unused)."""
    del pos, ghost  # see TODO(synk): they don't reach the '0e' output path

    n = Z.shape[0]
    tn = NODE_TILE if n >= NODE_TILE else _round_up(max(n, 1), 8)
    tiles = -(-n // tn)

    kind = _device_kind()
    # v7x: split the node reduction across the two TensorCores when possible.
    split = 2 if ("v7" in kind and tiles >= 2) else 1
    # v5e has no bf16 VPU/EUP; keep the gate in f32 there.
    gate_bf16 = "v5" not in kind

    tiles_per_split = -(-tiles // split)
    n_pad = split * tiles_per_split * tn

    # Pad node indices; sentinel VOCAB_PAD gives an all-zero one-hot row, which
    # stays zero through bias-free layers and SiLU -> contributes 0 to the sum.
    z_pad = jnp.full((n_pad,), VOCAB_PAD, dtype=jnp.int32)
    z_pad = z_pad.at[:n].set(Z.astype(jnp.int32))
    z_col = z_pad.reshape(n_pad, 1)

    flops = n_pad * (2 * VOCAB_PAD * HIDDEN + N_LAYERS * 2 * HIDDEN * HIDDEN)
    transcendentals = N_LAYERS * n_pad * HIDDEN
    bytes_accessed = (n_pad * 4
                      + VOCAB_PAD * HIDDEN * 2
                      + N_LAYERS * HIDDEN * HIDDEN * 2
                      + split * HIDDEN * 4)

    partial_gfeat = pl.pallas_call(
        functools.partial(_gnn_kernel, gate_bf16=gate_bf16),
        out_shape=jax.ShapeDtypeStruct((split, 1, HIDDEN), jnp.float32),
        grid_spec=pltpu.PrefetchScalarGridSpec(
            num_scalar_prefetch=0,
            grid=(split, tiles_per_split),
            in_specs=[
                # Z tile for this (split, tile) pair.
                pl.BlockSpec((tn, 1),
                             lambda s, t: (s * tiles_per_split + t, 0)),
                # Resident weights (constant index maps -> stay in VMEM).
                pl.BlockSpec((VOCAB_PAD, HIDDEN), lambda s, t: (0, 0)),
                pl.BlockSpec((N_LAYERS, HIDDEN, HIDDEN), lambda s, t: (0, 0, 0)),
            ],
            out_specs=pl.BlockSpec((1, 1, HIDDEN), lambda s, t: (s, 0, 0)),
        ),
        compiler_params=pltpu.CompilerParams(
            dimension_semantics=("parallel", "arbitrary")),
        cost_estimate=pl.CostEstimate(
            flops=int(flops),
            transcendentals=int(transcendentals),
            bytes_accessed=int(bytes_accessed)),
    )(z_col, packed["embed"], packed["w_layers"])

    # Tiny finalize (~4 KFLOP): combine per-core partials, fused fc_h|fc_g
    # matmul with symmetrization + h|g concat layout pre-folded into w_hg/b_hg.
    g_feat = partial_gfeat.reshape(split, HIDDEN).sum(axis=0)
    out_flat = g_feat @ packed["w_hg"] + packed["b_hg"]
    return out_flat.reshape(D_SYM, 2 * D_SYM)


def init_params(key):
    ks = jax.random.split(key, 6)
    scale = 0.1
    return {
        "embed": scale * jax.random.normal(ks[0], (VOCAB, HIDDEN), jnp.float32),
        "w_layers": scale * jax.random.normal(ks[1], (N_LAYERS, HIDDEN, HIDDEN),
                                              jnp.float32),
        "w_h": scale * jax.random.normal(ks[2], (HIDDEN, DIM_H), jnp.float32),
        "b_h": scale * jax.random.normal(ks[3], (DIM_H,), jnp.float32),
        "w_g": scale * jax.random.normal(ks[4], (HIDDEN, DIM_G), jnp.float32),
        "b_g": scale * jax.random.normal(ks[5], (DIM_G,), jnp.float32),
    }


def pack_params(params):
    """Pre-folds symmetrization + h|g concat layout into one fused output
    weight/bias, pads the embedding table to 128 rows, casts layer weights to
    bf16.  Runs once, outside the hot path."""
    D = D_SYM
    perm = jnp.array([(k % D) * D + (k // D) for k in range(D * D)],
                     dtype=jnp.int32)           # flat index of the transpose

    w_h, b_h = params["w_h"], params["b_h"]
    w_g, b_g = params["w_g"], params["b_g"]
    w_h_s = 0.5 * (w_h + w_h[:, perm]); b_h_s = 0.5 * (b_h + b_h[perm])
    w_g_s = 0.5 * (w_g + w_g[:, perm]); b_g_s = 0.5 * (b_g + b_g[perm])

    # Column order so that out_flat[8i:8i+8] == row i of cat([h_sym, g_sym]).
    w_cols, b_cols = [], []
    for i in range(D):
        w_cols += [w_h_s[:, i * D:(i + 1) * D], w_g_s[:, i * D:(i + 1) * D]]
        b_cols += [b_h_s[i * D:(i + 1) * D], b_g_s[i * D:(i + 1) * D]]
    w_hg = jnp.concatenate(w_cols, axis=1).astype(jnp.float32)   # (HIDDEN, 32)
    b_hg = jnp.concatenate(b_cols, axis=0).astype(jnp.float32)   # (32,)

    embed_pad = jnp.zeros((VOCAB_PAD, HIDDEN), jnp.bfloat16)
    embed_pad = embed_pad.at[:VOCAB].set(params["embed"].astype(jnp.bfloat16))

    return {
        "embed": embed_pad,
        "w_layers": params["w_layers"].astype(jnp.bfloat16),
        "w_hg": w_hg,
        "b_hg": b_hg,
    }


def _reference_forward(Z, params):
    """Pure-JAX f32 reference of the module's effective math."""
    x = params["embed"][Z]
    for l in range(N_LAYERS):
        x = x @ params["w_layers"][l]
        x = x * jax.nn.sigmoid(x)
    g_feat = x.sum(0)
    h = (g_feat @ params["w_h"] + params["b_h"]).reshape(D_SYM, D_SYM)
    g = (g_feat @ params["w_g"] + params["b_g"]).reshape(D_SYM, D_SYM)
    h = 0.5 * (h + h.T)
    g = 0.5 * (g + g.T)
    return jnp.concatenate([h, g], axis=-1)


if __name__ == "__main__":
    key = jax.random.PRNGKey(0)
    k_p, k_z, k_pos = jax.random.split(key, 3)

    params = init_params(k_p)
    packed = pack_params(params)

    n_atoms = 8
    Z = jax.random.randint(k_z, (n_atoms,), 0, VOCAB, dtype=jnp.int32)
    pos = jax.random.normal(k_pos, (n_atoms, 3), jnp.float32)
    ghost = jnp.zeros((n_atoms,), jnp.float32)

    fwd = jax.jit(gnn_h_forward)
    out = fwd(Z, pos, ghost, packed)
    jax.block_until_ready(out)

    ref = _reference_forward(Z, params)
    assert out.shape == (D_SYM, 2 * D_SYM)
    assert jnp.all(jnp.isfinite(out))
    assert jnp.allclose(out, ref, atol=5e-3, rtol=2e-2), (out, ref)
    print("KERNEL_OK")
</pallas_src>

<mosaic_0001>
module attributes {stable_mosaic.version = 11 : i64} {
  func.func @_gnn_kernel(%arg0: i32, %arg1: i32, %arg2: memref<8x1xi32, #tpu.memory_space<vmem>>, %arg3: memref<128x64xbf16, #tpu.memory_space<vmem>>, %arg4: memref<4x64x64xbf16, #tpu.memory_space<vmem>>, %arg5: memref<1x1x64xf32, #tpu.memory_space<vmem>>) attributes {dimension_semantics = [#tpu.dimension_semantics<parallel>, #tpu.dimension_semantics<arbitrary>], iteration_bounds = array<i64: 1, 1>, scalar_prefetch = 0 : i64, scratch_operands = 0 : i64, tpu.core_type = #tpu.core_type<tc>, window_params = [{transform_indices = @transform_0, window_bounds = array<i64: 8, 1>}, {pipeline_mode = #tpu.pipeline_mode<synchronous>, transform_indices = @transform_1, window_bounds = array<i64: 128, 64>}, {pipeline_mode = #tpu.pipeline_mode<synchronous>, transform_indices = @transform_2, window_bounds = array<i64: 4, 64, 64>}, {transform_indices = @transform_3, window_bounds = array<i64: 1, 1, 64>}]} {
    %c0_i32 = arith.constant 0 : i32
    %0 = arith.cmpi eq, %arg1, %c0_i32 : i32
    %1 = arith.extui %0 : i1 to i32
    %c0_i32_0 = arith.constant 0 : i32
    %2 = arith.cmpi ne, %1, %c0_i32_0 : i32
    scf.if %2 {
      %cst_28 = arith.constant 0.000000e+00 : f32
      %59 = vector.broadcast %cst_28 : f32 to vector<1x1x64xf32>
      %c0_29 = arith.constant 0 : index
      %c0_30 = arith.constant 0 : index
      %c0_31 = arith.constant 0 : index
      %60 = vector.load %arg5[%c0_29, %c0_30, %c0_31] : memref<1x1x64xf32, #tpu.memory_space<vmem>>, vector<1x1x64xf32>
      tpu.vector_store %arg5[%c0_29, %c0_30, %c0_31], %59 {strides = array<i32>} : memref<1x1x64xf32, #tpu.memory_space<vmem>>, vector<1x1x64xf32>,
    } else {
    }
    %c0 = arith.constant 0 : index
    %c0_1 = arith.constant 0 : index
    %3 = vector.load %arg2[%c0, %c0_1] : memref<8x1xi32, #tpu.memory_space<vmem>>, vector<8x1xi32>
    %4 = tpu.iota {dimensions = array<i32: 1>} : vector<8x128xi32>
    %5 = vector.broadcast %3 : vector<8x1xi32> to vector<8x128xi32>
    %6 = arith.cmpi eq, %5, %4 : vector<8x128xi32>
    %7 = arith.extui %6 : vector<8x128xi1> to vector<8x128xi32>
    %8 = arith.sitofp %7 : vector<8x128xi32> to vector<8x128xf32>
    %9 = arith.truncf %8 : vector<8x128xf32> to vector<8x128xbf16>
    %c0_2 = arith.constant 0 : index
    %c0_3 = arith.constant 0 : index
    %10 = vector.load %arg3[%c0_2, %c0_3] : memref<128x64xbf16, #tpu.memory_space<vmem>>, vector<128x64xbf16>
    %cst = arith.constant dense<0.000000e+00> : vector<8x64xf32>
    %11 = tpu.matmul %9, %10, %cst {dimension_numbers = #tpu.dot_dimension_numbers<[1], [0], [0], [1], [0, 0, 1, 1], [], []>} : vector<8x128xbf16>, vector<128x64xbf16>, vector<8x64xf32> -> vector<8x64xf32>
    %12 = arith.truncf %11 : vector<8x64xf32> to vector<8x64xbf16>
    %c0_4 = arith.constant 0 : index
    %c0_5 = arith.constant 0 : index
    %c0_6 = arith.constant 0 : index
    %13 = vector.load %arg4[%c0_4, %c0_5, %c0_6] : memref<4x64x64xbf16, #tpu.memory_space<vmem>>, vector<1x64x64xbf16>
    %14 = vector.shape_cast %13 : vector<1x64x64xbf16> to vector<64x64xbf16>
    %cst_7 = arith.constant dense<0.000000e+00> : vector<8x64xf32>
    %15 = tpu.matmul %12, %14, %cst_7 {dimension_numbers = #tpu.dot_dimension_numbers<[1], [0], [0], [1], [0, 0, 1, 1], [], []>} : vector<8x64xbf16>, vector<64x64xbf16>, vector<8x64xf32> -> vector<8x64xf32>
    %16 = arith.truncf %15 : vector<8x64xf32> to vector<8x64xbf16>
    %17 = arith.negf %16 : vector<8x64xbf16>
    %18 = math.exp %17 : vector<8x64xbf16>
    %cst_8 = arith.constant 1.000000e+00 : bf16
    %19 = vector.broadcast %cst_8 : bf16 to vector<8x64xbf16>
    %20 = arith.addf %19, %18 : vector<8x64xbf16>
    %21 = arith.divf %19, %20 : vector<8x64xbf16>
    %22 = arith.mulf %16, %21 : vector<8x64xbf16>
    %c1 = arith.constant 1 : index
    %c0_9 = arith.constant 0 : index
    %c0_10 = arith.constant 0 : index
    %23 = vector.load %arg4[%c1, %c0_9, %c0_10] : memref<4x64x64xbf16, #tpu.memory_space<vmem>>, vector<1x64x64xbf16>
    %24 = vector.shape_cast %23 : vector<1x64x64xbf16> to vector<64x64xbf16>
    %cst_11 = arith.constant dense<0.000000e+00> : vector<8x64xf32>
    %25 = tpu.matmul %22, %24, %cst_11 {dimension_numbers = #tpu.dot_dimension_numbers<[1], [0], [0], [1], [0, 0, 1, 1], [], []>} : vector<8x64xbf16>, vector<64x64xbf16>, vector<8x64xf32> -> vector<8x64xf32>
    %26 = arith.truncf %25 : vector<8x64xf32> to vector<8x64xbf16>
    %27 = arith.negf %26 : vector<8x64xbf16>
    %28 = math.exp %27 : vector<8x64xbf16>
    %cst_12 = arith.constant 1.000000e+00 : bf16
    %29 = vector.broadcast %cst_12 : bf16 to vector<8x64xbf16>
    %30 = arith.addf %29, %28 : vector<8x64xbf16>
    %31 = arith.divf %29, %30 : vector<8x64xbf16>
    %32 = arith.mulf %26, %31 : vector<8x64xbf16>
    %c2 = arith.constant 2 : index
    %c0_13 = arith.constant 0 : index
    %c0_14 = arith.constant 0 : index
    %33 = vector.load %arg4[%c2, %c0_13, %c0_14] : memref<4x64x64xbf16, #tpu.memory_space<vmem>>, vector<1x64x64xbf16>
    %34 = vector.shape_cast %33 : vector<1x64x64xbf16> to vector<64x64xbf16>
    %cst_15 = arith.constant dense<0.000000e+00> : vector<8x64xf32>
    %35 = tpu.matmul %32, %34, %cst_15 {dimension_numbers = #tpu.dot_dimension_numbers<[1], [0], [0], [1], [0, 0, 1, 1], [], []>} : vector<8x64xbf16>, vector<64x64xbf16>, vector<8x64xf32> -> vector<8x64xf32>
    %36 = arith.truncf %35 : vector<8x64xf32> to vector<8x64xbf16>
    %37 = arith.negf %36 : vector<8x64xbf16>
    %38 = math.exp %37 : vector<8x64xbf16>
    %cst_16 = arith.constant 1.000000e+00 : bf16
    %39 = vector.broadcast %cst_16 : bf16 to vector<8x64xbf16>
    %40 = arith.addf %39, %38 : vector<8x64xbf16>
    %41 = arith.divf %39, %40 : vector<8x64xbf16>
    %42 = arith.mulf %36, %41 : vector<8x64xbf16>
    %c3 = arith.constant 3 : index
    %c0_17 = arith.constant 0 : index
    %c0_18 = arith.constant 0 : index
    %43 = vector.load %arg4[%c3, %c0_17, %c0_18] : memref<4x64x64xbf16, #tpu.memory_space<vmem>>, vector<1x64x64xbf16>
    %44 = vector.shape_cast %43 : vector<1x64x64xbf16> to vector<64x64xbf16>
    %cst_19 = arith.constant dense<0.000000e+00> : vector<8x64xf32>
    %45 = tpu.matmul %42, %44, %cst_19 {dimension_numbers = #tpu.dot_dimension_numbers<[1], [0], [0], [1], [0, 0, 1, 1], [], []>} : vector<8x64xbf16>, vector<64x64xbf16>, vector<8x64xf32> -> vector<8x64xf32>
    %46 = arith.truncf %45 : vector<8x64xf32> to vector<8x64xbf16>
    %47 = arith.negf %46 : vector<8x64xbf16>
    %48 = math.exp %47 : vector<8x64xbf16>
    %cst_20 = arith.constant 1.000000e+00 : bf16
    %49 = vector.broadcast %cst_20 : bf16 to vector<8x64xbf16>
    %50 = arith.addf %49, %48 : vector<8x64xbf16>
    %51 = arith.divf %49, %50 : vector<8x64xbf16>
    %52 = arith.mulf %46, %51 : vector<8x64xbf16>
    %53 = arith.extf %52 : vector<8x64xbf16> to vector<8x64xf32>
    %c0_21 = arith.constant 0 : index
    %c0_22 = arith.constant 0 : index
    %c0_23 = arith.constant 0 : index
    %54 = vector.load %arg5[%c0_21, %c0_22, %c0_23] : memref<1x1x64xf32, #tpu.memory_space<vmem>>, vector<1x1x64xf32>
    %cst_24 = arith.constant dense<0.000000e+00> : vector<64xf32>
    %55 = vector.multi_reduction <add>, %53, %cst_24 [0] : vector<8x64xf32> to vector<64xf32>
    %56 = vector.shape_cast %55 : vector<64xf32> to vector<1x1x64xf32>
    %57 = arith.addf %54, %56 : vector<1x1x64xf32>
    %c0_25 = arith.constant 0 : index
    %c0_26 = arith.constant 0 : index
    %c0_27 = arith.constant 0 : index
    %58 = vector.load %arg5[%c0_25, %c0_26, %c0_27] : memref<1x1x64xf32, #tpu.memory_space<vmem>>, vector<1x1x64xf32>
    tpu.vector_store %arg5[%c0_25, %c0_26, %c0_27], %57 {strides = array<i32>} : memref<1x1x64xf32, #tpu.memory_space<vmem>>, vector<1x1x64xf32>,
    return
  }
  func.func @transform_0(%arg0: i32, %arg1: i32) -> (i32, i32) {
    %c1_i32 = arith.constant 1 : i32
    %0 = arith.muli %arg0, %c1_i32 : i32
    %1 = arith.addi %0, %arg1 : i32
    %c0_i32 = arith.constant 0 : i32
    %c0_i32_0 = arith.constant 0 : i32
    return %1, %c0_i32 : i32, i32
  }
  func.func @transform_1(%arg0: i32, %arg1: i32) -> (i32, i32) {
    %c0_i32 = arith.constant 0 : i32
    %c0_i32_0 = arith.constant 0 : i32
    %c0_i32_1 = arith.constant 0 : i32
    return %c0_i32, %c0_i32_0 : i32, i32
  }
  func.func @transform_2(%arg0: i32, %arg1: i32) -> (i32, i32, i32) {
    %c0_i32 = arith.constant 0 : i32
    %c0_i32_0 = arith.constant 0 : i32
    %c0_i32_1 = arith.constant 0 : i32
    %c0_i32_2 = arith.constant 0 : i32
    return %c0_i32, %c0_i32_0, %c0_i32_1 : i32, i32, i32
  }
  func.func @transform_3(%arg0: i32, %arg1: i32) -> (i32, i32, i32) {
    %c0_i32 = arith.constant 0 : i32
    %c0_i32_0 = arith.constant 0 : i32
    %c0_i32_1 = arith.constant 0 : i32
    return %arg0, %c0_i32, %c0_i32_0 : i32, i32, i32
  }
}

</mosaic_0001>

<llo_original>
// kernel: gnn_h_forward.1
$region0: #{gnn_h_forward.1}
  #allocation0 [shape = 'u32[]', space=smem, size = 0x4, offset = 0x4, fixed_abs, tag = 'smem constant byte address 0x4 - core index']
  #allocation1 [shape = 'u32[72,128]{1,0:T(1,128)}', space=vmem, size = 0x9000, scoped, tag = 'internal scratch']
  %s0 = inlined_call_operand.vmem [shape: s32[8,1], index: 0, kind: input, shape index: {}]
  %s1 = inlined_call_operand.vmem [shape: bf16[128,64], index: 1, kind: input, shape index: {}]
  %s2 = inlined_call_operand.hbm [shape: bf16[4,64,64], index: 2, kind: input, shape index: {}]
  %s3 = inlined_call_operand.vmem [shape: f32[1,1,64], index: 3, kind: output, shape index: {}]
  %s4 = sld [smem:[#allocation0]]
  $region30: #{gnn_h_forward.1} parent=0
    _
  %s6 = ssub.s32 1, %s4
  %s7 = scalar_select 0, %s6, %s4
  $region1: #{gnn_h_forward.1} parent=0
    #allocation2 [shape = 'u8[65536]{0}', space=vmem, size = 0x10000, scoped, tag = 'input window, operand 2, single buffered']
    #allocation3 [shape = 's32[1]{0}', space=sflag, size = 0x4, scoped, tag = 'scoped memory for gnn_h_forward.1']
    %8 = vsyncpa [#allocation3], 0
    // Predicated region
    $region2: #{gnn_h_forward.1} parent=1 // pred_check
      _
    $region3: #{gnn_h_forward.1} parent=1 // pred_check_branch
      %10 = sbr.rel (0) target = $region5
    $region4: #{gnn_h_forward.1} parent=1 // pred_region
      %s11 = sadd.s32 0, 0
      %p12 = scmp.lt.s32.totalorder %s11, 0
      %s13 = scalar_select %p12, %s11, 0
      %s14 = smul.addr %s13, 8
      %s15 = scalar_lea.vmem %s0, %s14
      %s16 = sadd.s32 0, 0
    $region5: #{gnn_h_forward.1} parent=1 // pred_fallthru
      _
    // Predicated region
    $region6: #{gnn_h_forward.1} parent=1 // pred_check
      _
    $region7: #{gnn_h_forward.1} parent=1 // pred_check_branch
      %18 = sbr.rel (0) target = $region9
    $region8: #{gnn_h_forward.1} parent=1 // pred_region
      _
    $region9: #{gnn_h_forward.1} parent=1 // pred_fallthru
      _
    // Predicated region
    $region10: #{gnn_h_forward.1} parent=1 // pred_check
      _
    $region11: #{gnn_h_forward.1} parent=1 // pred_check_branch
      %20 = sbr.rel (0) target = $region13
    $region12: #{gnn_h_forward.1} parent=1 // pred_region
      %22 = vsyncadd [#allocation3], 0
      %s23 = sshll.u32 %s2, 4
      %s24 = int_to_ptr.hbm [resolvable:$true] %s23
      %s25 = sshll.u32 [#allocation2], 4
      %s26 = int_to_ptr.vmem [resolvable:$true] %s25
      %31 = dma.hbm_to_vmem [thread:$0]  %s24, 2048, %s26, [#allocation3], 64, 64, 4
    $region13: #{gnn_h_forward.1} parent=1 // pred_fallthru
      _
    // Predicated region
    $region14: #{gnn_h_forward.1} parent=1 // pred_check
      _
    $region15: #{gnn_h_forward.1} parent=1 // pred_check_branch
      %33 = sbr.rel (0) target = $region17
    $region16: #{gnn_h_forward.1} parent=1 // pred_region
      %35 = dma.done [#allocation3], 2048
    $region17: #{gnn_h_forward.1} parent=1 // pred_fallthru
      _
    %s36 = sadd.s32 0, 0
    %p37 = scmp.lt.s32.totalorder %s36, 0
    %s38 = scalar_select %p37, %s36, 0
    %s39 = smul.addr %s38, 8
    %s40 = scalar_lea.vmem %s0, %s39
    %s41 = sadd.s32 0, 0
    %p42 = scmp.lt.s32.totalorder %s41, 0
    %s43 = scalar_select %p42, %s41, 0
    %s44 = smul.addr %s43, 8
    %s45 = scalar_lea.vmem %s0, %s44
    %s46 = sadd.s32 0, 0
    %p49 = scmp.eq.s32.totalorder 0, 0
    // Predicated region
    $region18: #{gnn_h_forward.1} parent=1 // pred_check
      %p50 = pneg %p49
    $region19: #{gnn_h_forward.1} parent=1 // pred_check_branch
      %52 = sbr.rel (%p50) target = $region21
    $region20: #{gnn_h_forward.1} parent=1 // pred_region
      %vm53 = vcmask 516096
      %54 = vst.msk [vmem:[%s3] sm:$0x1] %vm53, 0.0
    $region21: #{gnn_h_forward.1} parent=1 // pred_fallthru
      _
    %v55 = vld [vmem:[%s45] sm:$0xff]
    %v56 = vlaneseq
    %v57 = vand.u32 %v56, 127
    %58 = vset.pattern.permute.xlu0 0
    %59 = vperm.xlu0 %58, %v55
    %v60 = vpop.permute.xlu0 %59
    %vm61 = vcmp.eq.s32.totalorder %v60, %v57
    %v62 = vsel %vm61, 1, 0
    %v63 = vcvt.s32.f32 %v62
    %v64 = vpack.c.bf16 %v63, %v63
    %v65 = vld [vmem:[%s1] sm:$0xf]
    %v66 = vld [vmem:[%s1 + $0x4] sm:$0xf]
    %v67 = vld [vmem:[%s1 + $0x8] sm:$0xf]
    %v68 = vld [vmem:[%s1 + $0xc] sm:$0xf]
    %v69 = vld [vmem:[%s1 + $0x10] sm:$0xf]
    %v70 = vld [vmem:[%s1 + $0x14] sm:$0xf]
    %v71 = vld [vmem:[%s1 + $0x18] sm:$0xf]
    %v72 = vld [vmem:[%s1 + $0x1c] sm:$0xf]
    %v73 = vld [vmem:[%s1 + $0x20] sm:$0xf]
    %v74 = vld [vmem:[%s1 + $0x24] sm:$0xf]
    %v75 = vld [vmem:[%s1 + $0x28] sm:$0xf]
    %v76 = vld [vmem:[%s1 + $0x2c] sm:$0xf]
    %v77 = vld [vmem:[%s1 + $0x30] sm:$0xf]
    %v78 = vld [vmem:[%s1 + $0x34] sm:$0xf]
    %v79 = vld [vmem:[%s1 + $0x38] sm:$0xf]
    %v80 = vld [vmem:[%s1 + $0x3c] sm:$0xf]
    %v97 = vunpack.c.l.b16 %v65
    %v98 = vunpack.c.l.b16 %v66
    %v99 = vunpack.c.l.b16 %v67
    %v100 = vunpack.c.l.b16 %v68
    %v101 = vunpack.c.l.b16 %v69
    %v102 = vunpack.c.l.b16 %v70
    %v103 = vunpack.c.l.b16 %v71
    %v104 = vunpack.c.l.b16 %v72
    %v105 = vunpack.c.l.b16 %v73
    %v106 = vunpack.c.l.b16 %v74
    %v107 = vunpack.c.l.b16 %v75
    %v108 = vunpack.c.l.b16 %v76
    %v109 = vunpack.c.l.b16 %v77
    %v110 = vunpack.c.l.b16 %v78
    %v111 = vunpack.c.l.b16 %v79
    %v112 = vunpack.c.l.b16 %v80
    %v113 = vpack.c.b16 %v98, %v97
    %v114 = vpack.c.b16 %v100, %v99
    %v115 = vpack.c.b16 %v102, %v101
    %v116 = vpack.c.b16 %v104, %v103
    %v117 = vpack.c.b16 %v106, %v105
    %v118 = vpack.c.b16 %v108, %v107
    %v119 = vpack.c.b16 %v110, %v109
    %v120 = vpack.c.b16 %v112, %v111
    %129 = vmatpush.bf16.msra.mxu0 %v120
    %130 = vmatpush.bf16.msra.mxu0 %v119
    %131 = vmatpush.bf16.msra.mxu0 %v118
    %132 = vmatpush.bf16.msra.mxu0 %v117
    %133 = vmatpush.bf16.msra.mxu0 %v116
    %134 = vmatpush.bf16.msra.mxu0 %v115
    %135 = vmatpush.bf16.msra.mxu0 %v114
    %136 = vmatpush.bf16.msra.mxu0 %v113
    %137 = vmatmul.bf16.gmra.mxu0 %v64
    %v138 = vpop.f32.mrf.mxu0
    %v139 = vadd.f32 0.0, %v138
    %v140 = vpop.f32.mrf.mxu0
    %141 = vdwg.mxu0
    %v142 = vpack.c.bf16 %v139, %v139
    %v143 = vld [vmem:[#allocation2] sm:$0xf]
    %v144 = vld [vmem:[#allocation2 + $0x4] sm:$0xf]
    %v145 = vld [vmem:[#allocation2 + $0x8] sm:$0xf]
    %v146 = vld [vmem:[#allocation2 + $0xc] sm:$0xf]
    %v147 = vld [vmem:[#allocation2 + $0x10] sm:$0xf]
    %v148 = vld [vmem:[#allocation2 + $0x14] sm:$0xf]
    %v149 = vld [vmem:[#allocation2 + $0x18] sm:$0xf]
    %v150 = vld [vmem:[#allocation2 + $0x1c] sm:$0xf]
    %v159 = vunpack.c.l.b16 %v143
    %v160 = vunpack.c.l.b16 %v144
    %v161 = vunpack.c.l.b16 %v145
    %v162 = vunpack.c.l.b16 %v146
    %v163 = vunpack.c.l.b16 %v147
    %v164 = vunpack.c.l.b16 %v148
    %v165 = vunpack.c.l.b16 %v149
    %v166 = vunpack.c.l.b16 %v150
    %v167 = vpack.c.b16 %v160, %v159
    %v168 = vpack.c.b16 %v162, %v161
    %v169 = vpack.c.b16 %v164, %v163
    %v170 = vpack.c.b16 %v166, %v165
    %vm175 = vcmask 523264
    %v177 = vsel %vm175, %v142, 0
    %179 = vmatpush.bf16.msra.mxu0 0
    %180 = vmatpush.bf16.msra.mxu0 0
    %181 = vmatpush.bf16.msra.mxu0 0
    %182 = vmatpush.bf16.msra.mxu0 0
    %183 = vmatpush.bf16.msra.mxu0 %v170
    %184 = vmatpush.bf16.msra.mxu0 %v169
    %185 = vmatpush.bf16.msra.mxu0 %v168
    %186 = vmatpush.bf16.msra.mxu0 %v167
    %187 = vmatmul.bf16.gmra.mxu0 %v177
    %v188 = vpop.f32.mrf.mxu0
    %v189 = vadd.f32 0.0, %v188
    %v190 = vpop.f32.mrf.mxu0
    %191 = vdwg.mxu0
    %v192 = vpack.c.bf16 %v189, %v189
    %v193 = vxor.u32 %v192, 2147516416
    %v194 = vunpack.c.l.bf16 %v193
    %v195 = vmul.f32 %v194, 1.442695
    %v196 = vpow.pop %v195
    %v197 = vpack.c.bf16 %v196, %v196
    %v198 = vunpack.c.l.bf16 %v197
    %v199 = vadd.f32 %v198, 1.0
    %v200 = vpack.c.bf16 %v199, %v199
    %v201 = vunpack.c.h.bf16 1065369472
    %v202 = vunpack.c.l.bf16 1065369472
    %v203 = vunpack.c.h.bf16 %v200
    %v204 = vunpack.c.l.bf16 %v200
    %v205 = vrcp.pop %v203
    %v206 = vmul.f32 %v201, %v205
    %v207 = vrcp.pop %v204
    %v208 = vmul.f32 %v202, %v207
    %v209 = vpack.c.bf16 %v206, %v208
    %v210 = vunpack.c.l.bf16 %v192
    %v211 = vunpack.c.l.bf16 %v209
    %v212 = vmul.f32 %v210, %v211
    %v213 = vpack.c.bf16 %v212, %v212
    %s214 = scalar_lea.vmem [#allocation2], 32
    %v215 = vld [vmem:[%s214] sm:$0xf]
    %v216 = vld [vmem:[%s214 + $0x4] sm:$0xf]
    %v217 = vld [vmem:[%s214 + $0x8] sm:$0xf]
    %v218 = vld [vmem:[%s214 + $0xc] sm:$0xf]
    %v219 = vld [vmem:[%s214 + $0x10] sm:$0xf]
    %v220 = vld [vmem:[%s214 + $0x14] sm:$0xf]
    %v221 = vld [vmem:[%s214 + $0x18] sm:$0xf]
    %v222 = vld [vmem:[%s214 + $0x1c] sm:$0xf]
    %v231 = vunpack.c.l.b16 %v215
    %v232 = vunpack.c.l.b16 %v216
    %v233 = vunpack.c.l.b16 %v217
    %v234 = vunpack.c.l.b16 %v218
    %v235 = vunpack.c.l.b16 %v219
    %v236 = vunpack.c.l.b16 %v220
    %v237 = vunpack.c.l.b16 %v221
    %v238 = vunpack.c.l.b16 %v222
    %v239 = vpack.c.b16 %v232, %v231
    %v240 = vpack.c.b16 %v234, %v233
    %v241 = vpack.c.b16 %v236, %v235
    %v242 = vpack.c.b16 %v238, %v237
    %v248 = vsel %vm175, %v213, 0
    %250 = vmatpush.bf16.msra.mxu0 0
    %251 = vmatpush.bf16.msra.mxu0 0
    %252 = vmatpush.bf16.msra.mxu0 0
    %253 = vmatpush.bf16.msra.mxu0 0
    %254 = vmatpush.bf16.msra.mxu0 %v242
    %255 = vmatpush.bf16.msra.mxu0 %v241
    %256 = vmatpush.bf16.msra.mxu0 %v240
    %257 = vmatpush.bf16.msra.mxu0 %v239
    %258 = vmatmul.bf16.gmra.mxu0 %v248
    %v259 = vpop.f32.mrf.mxu0
    %v260 = vadd.f32 0.0, %v259
    %v261 = vpop.f32.mrf.mxu0
    %262 = vdwg.mxu0
    %v263 = vpack.c.bf16 %v260, %v260
    %v264 = vxor.u32 %v263, 2147516416
    %v265 = vunpack.c.l.bf16 %v264
    %v266 = vmul.f32 %v265, 1.442695
    %v267 = vpow.pop %v266
    %v268 = vpack.c.bf16 %v267, %v267
    %v269 = vunpack.c.l.bf16 %v268
    %v270 = vadd.f32 %v269, 1.0
    %v271 = vpack.c.bf16 %v270, %v270
    %v272 = vunpack.c.h.bf16 %v271
    %v273 = vunpack.c.l.bf16 %v271
    %v274 = vrcp.pop %v272
    %v275 = vmul.f32 %v201, %v274
    %v276 = vrcp.pop %v273
    %v277 = vmul.f32 %v202, %v276
    %v278 = vpack.c.bf16 %v275, %v277
    %v279 = vunpack.c.l.bf16 %v263
    %v280 = vunpack.c.l.bf16 %v278
    %v281 = vmul.f32 %v279, %v280
    %v282 = vpack.c.bf16 %v281, %v281
    %s283 = scalar_lea.vmem [#allocation2], 64
    %v284 = vld [vmem:[%s283] sm:$0xf]
    %v285 = vld [vmem:[%s283 + $0x4] sm:$0xf]
    %v286 = vld [vmem:[%s283 + $0x8] sm:$0xf]
    %v287 = vld [vmem:[%s283 + $0xc] sm:$0xf]
    %v288 = vld [vmem:[%s283 + $0x10] sm:$0xf]
    %v289 = vld [vmem:[%s283 + $0x14] sm:$0xf]
    %v290 = vld [vmem:[%s283 + $0x18] sm:$0xf]
    %v291 = vld [vmem:[%s283 + $0x1c] sm:$0xf]
    %v300 = vunpack.c.l.b16 %v284
    %v301 = vunpack.c.l.b16 %v285
    %v302 = vunpack.c.l.b16 %v286
    %v303 = vunpack.c.l.b16 %v287
    %v304 = vunpack.c.l.b16 %v288
    %v305 = vunpack.c.l.b16 %v289
    %v306 = vunpack.c.l.b16 %v290
    %v307 = vunpack.c.l.b16 %v291
    %v308 = vpack.c.b16 %v301, %v300
    %v309 = vpack.c.b16 %v303, %v302
    %v310 = vpack.c.b16 %v305, %v304
    %v311 = vpack.c.b16 %v307, %v306
    %v317 = vsel %vm175, %v282, 0
    %319 = vmatpush.bf16.msra.mxu0 0
    %320 = vmatpush.bf16.msra.mxu0 0
    %321 = vmatpush.bf16.msra.mxu0 0
    %322 = vmatpush.bf16.msra.mxu0 0
    %323 = vmatpush.bf16.msra.mxu0 %v311
    %324 = vmatpush.bf16.msra.mxu0 %v310
    %325 = vmatpush.bf16.msra.mxu0 %v309
    %326 = vmatpush.bf16.msra.mxu0 %v308
    %327 = vmatmul.bf16.gmra.mxu0 %v317
    %v328 = vpop.f32.mrf.mxu0
    %v329 = vadd.f32 0.0, %v328
    %v330 = vpop.f32.mrf.mxu0
    %331 = vdwg.mxu0
    %v332 = vpack.c.bf16 %v329, %v329
    %v333 = vxor.u32 %v332, 2147516416
    %v334 = vunpack.c.l.bf16 %v333
    %v335 = vmul.f32 %v334, 1.442695
    %v336 = vpow.pop %v335
    %v337 = vpack.c.bf16 %v336, %v336
    %v338 = vunpack.c.l.bf16 %v337
    %v339 = vadd.f32 %v338, 1.0
    %v340 = vpack.c.bf16 %v339, %v339
    %v341 = vunpack.c.h.bf16 %v340
    %v342 = vunpack.c.l.bf16 %v340
    %v343 = vrcp.pop %v341
    %v344 = vmul.f32 %v201, %v343
    %v345 = vrcp.pop %v342
    %v346 = vmul.f32 %v202, %v345
    %v347 = vpack.c.bf16 %v344, %v346
    %v348 = vunpack.c.l.bf16 %v332
    %v349 = vunpack.c.l.bf16 %v347
    %v350 = vmul.f32 %v348, %v349
    %v351 = vpack.c.bf16 %v350, %v350
    %s352 = scalar_lea.vmem [#allocation2], 96
    %v353 = vld [vmem:[%s352] sm:$0xf]
    %v354 = vld [vmem:[%s352 + $0x4] sm:$0xf]
    %v355 = vld [vmem:[%s352 + $0x8] sm:$0xf]
    %v356 = vld [vmem:[%s352 + $0xc] sm:$0xf]
    %v357 = vld [vmem:[%s352 + $0x10] sm:$0xf]
    %v358 = vld [vmem:[%s352 + $0x14] sm:$0xf]
    %v359 = vld [vmem:[%s352 + $0x18] sm:$0xf]
    %v360 = vld [vmem:[%s352 + $0x1c] sm:$0xf]
    %v369 = vunpack.c.l.b16 %v353
    %v370 = vunpack.c.l.b16 %v354
    %v371 = vunpack.c.l.b16 %v355
    %v372 = vunpack.c.l.b16 %v356
    %v373 = vunpack.c.l.b16 %v357
    %v374 = vunpack.c.l.b16 %v358
    %v375 = vunpack.c.l.b16 %v359
    %v376 = vunpack.c.l.b16 %v360
    %v377 = vpack.c.b16 %v370, %v369
    %v378 = vpack.c.b16 %v372, %v371
    %v379 = vpack.c.b16 %v374, %v373
    %v380 = vpack.c.b16 %v376, %v375
    %v386 = vsel %vm175, %v351, 0
    %388 = vmatpush.bf16.msra.mxu0 0
    %389 = vmatpush.bf16.msra.mxu0 0
    %390 = vmatpush.bf16.msra.mxu0 0
    %391 = vmatpush.bf16.msra.mxu0 0
    %392 = vmatpush.bf16.msra.mxu0 %v380
    %393 = vmatpush.bf16.msra.mxu0 %v379
    %394 = vmatpush.bf16.msra.mxu0 %v378
    %395 = vmatpush.bf16.msra.mxu0 %v377
    %396 = vmatmul.bf16.gmra.mxu0 %v386
    %v397 = vpop.f32.mrf.mxu0
    %v398 = vadd.f32 0.0, %v397
    %v399 = vpop.f32.mrf.mxu0
    %400 = vdwg.mxu0
    %v401 = vpack.c.bf16 %v398, %v398
    %v402 = vxor.u32 %v401, 2147516416
    %v403 = vunpack.c.l.bf16 %v402
    %v404 = vmul.f32 %v403, 1.442695
    %v405 = vpow.pop %v404
    %v406 = vpack.c.bf16 %v405, %v405
    %v407 = vunpack.c.l.bf16 %v406
    %v408 = vadd.f32 %v407, 1.0
    %v409 = vpack.c.bf16 %v408, %v408
    %v410 = vunpack.c.h.bf16 %v409
    %v411 = vunpack.c.l.bf16 %v409
    %v412 = vrcp.pop %v410
    %v413 = vmul.f32 %v201, %v412
    %v414 = vrcp.pop %v411
    %v415 = vmul.f32 %v202, %v414
    %v416 = vpack.c.bf16 %v413, %v415
    %v417 = vunpack.c.l.bf16 %v401
    %v418 = vunpack.c.l.bf16 %v416
    %v419 = vmul.f32 %v417, %v418
    %v420 = vpack.c.bf16 %v419, %v419
    %v421 = vunpack.c.l.bf16 %v420
    %v422 = vld [vmem:[%s3] sm:$0x1]
    %v423 = vsel %vm175, %v421, 0.0
    %v424 = vrot.slane %v423, 4
    %v425 = vadd.f32 %v423, %v424
    %v426 = vrot.slane %v425, 2
    %v427 = vadd.f32 %v425, %v426
    %v428 = vrot.slane %v427, 1
    %v429 = vadd.f32 %v427, %v428
    %v430 = vadd.f32 %v422, %v429
    %vm431 = vcmask 516096
    %432 = vst.msk [vmem:[%s3] sm:$0x1] %vm431, %v430
    // Predicated region
    $region22: #{gnn_h_forward.1} parent=1 // pred_check
      _
    $region23: #{gnn_h_forward.1} parent=1 // pred_check_branch
      %434 = sbr.rel (0) target = $region25
    $region24: #{gnn_h_forward.1} parent=1 // pred_region
      _
    $region25: #{gnn_h_forward.1} parent=1 // pred_fallthru
      _
    // Predicated region
    $region26: #{gnn_h_forward.1} parent=1 // pred_check
      _
    $region27: #{gnn_h_forward.1} parent=1 // pred_check_branch
      %436 = sbr.rel (0) target = $region29
    $region28: #{gnn_h_forward.1} parent=1 // pred_region
      _
    $region29: #{gnn_h_forward.1} parent=1 // pred_fallthru
      _
    %437 = vsyncpa [#allocation3], 1

</llo_original>
